<compile_context>
chip_gen: v7x
topology: tpu7x:2x2x1
jax: 0.10.0
libtpu: 0.0.40
codegen_flags: <defaults>
</compile_context>

<pallas_src>
import math

import jax
import jax.numpy as jnp
from jax.experimental import pallas as pl
from jax.experimental.pallas import tpu as pltpu

LANES = 128

# GHF parameters (compile-time constants, matching the PyTorch buffers).
_T = 0.5
_M1 = -1.001
_M2 = 50.0


def _make_ghf_kernel(t, m1, m2):
    t = float(t)
    m1 = float(m1)
    m2 = float(m2)
    num = 1.0 + m1 * t
    m2t = m2 * t

    if m2t > 0.0:
        # Sigmoid / tanh reformulation (exact identity for m2*t > 0):
        #   1 / (1 + m2*t*exp(-s/t)) = sigmoid(s/t - log(m2*t))
        #   out = num * 0.5 * (1 + tanh(0.5*(s/t - log(m2*t))))
        half_num = 0.5 * num
        half_inv_t = 0.5 / t
        half_log = 0.5 * math.log(m2t)

        def kernel(s_ref, o_ref):
            # Upcast in-register only; HBM traffic stays in the input dtype.
            s = s_ref[...].astype(jnp.float32)
            z = s * half_inv_t - half_log
            out = half_num * (1.0 + jnp.tanh(z))
            o_ref[...] = out.astype(o_ref.dtype)

    else:
        # Fallback: explicit form (only reachable for non-default params).
        neg_inv_t = -1.0 / t

        def kernel(s_ref, o_ref):
            s = s_ref[...].astype(jnp.float32)
            den = 1.0 + m2t * jnp.exp(s * neg_inv_t)
            out = num * pl.reciprocal(den, approx=False)
            o_ref[...] = out.astype(o_ref.dtype)

    return kernel


def _sublane_multiple(dtype):
    # 8 rows for 32-bit, 16 for 16-bit, 32 for 8-bit (packed sublanes).
    itemsize = jnp.dtype(dtype).itemsize
    return 8 * max(1, 4 // itemsize)


def _choose_width(n, sub_mult):
    # Widest lane-dense last dim (multiple of 128) that still yields at least
    # one full (sub_mult, W) tile of real data -> unmasked full-width stores
    # and wide contiguous DMAs without excessive tail handling.
    for w in (2048, 1024, 512, 256):
        if n >= sub_mult * w:
            return w
    return LANES


def _run_ghf_2d(x2d, kernel, target_block_elems):
    rows, w = x2d.shape
    dtype = x2d.dtype
    sub_mult = _sublane_multiple(dtype)

    def _round_down(v):
        return max(sub_mult, (v // sub_mult) * sub_mult)

    # ~target_block_elems per block (2 MiB f32 by default: v5e-safe double
    # buffered), capped at rows//4 so large tensors get >= 4 parallel grid
    # steps (pipelining + megacore sharding on v7x).
    row_tile = min(rows, _round_down(target_block_elems // w))
    if rows >= 4 * sub_mult:
        row_tile = min(row_tile, _round_down(rows // 4))

    grid = (pl.cdiv(rows, row_tile),)

    # Double-buffered input + output blocks, plus headroom for Mosaic scratch.
    block_bytes = row_tile * w * jnp.dtype(dtype).itemsize
    vmem_limit = int(min(64 << 20, 4 * block_bytes + (8 << 20)))

    return pl.pallas_call(
        kernel,
        out_shape=jax.ShapeDtypeStruct((rows, w), dtype),
        grid=grid,
        in_specs=[pl.BlockSpec((row_tile, w), lambda i: (i, 0))],
        out_specs=pl.BlockSpec((row_tile, w), lambda i: (i, 0)),
        compiler_params=pltpu.CompilerParams(
            dimension_semantics=("parallel",),
            vmem_limit_bytes=vmem_limit,
        ),
    )(x2d)


def _ghf_jnp(s, t=_T, m1=_M1, m2=_M2):
    s32 = s.astype(jnp.float32)
    num = 1.0 + m1 * t
    den = 1.0 + m2 * t * jnp.exp(-s32 / t)
    return (num / den).astype(s.dtype)


def act_ghf(s, t=_T, m1=_M1, m2=_M2, *, target_block_elems=1 << 19):
    """Elementwise GHF activation: (1 + m1*t) / (1 + m2*t*exp(-s/t)).

    Works on any shape (e.g. NCHW).  Keeps the input dtype end-to-end through
    the pallas_call; math is done in f32 in-register.
    """
    # TODO(synk): only ActGHFFunction.forward is implemented; the custom
    # backward (grad_s) is not translated here.
    orig_shape = s.shape
    dtype = s.dtype
    kernel = _make_ghf_kernel(t, m1, m2)

    x = s.reshape(-1)
    n = x.shape[0]
    if n == 0:
        return s

    sub_mult = _sublane_multiple(dtype)
    w = _choose_width(n, sub_mult)
    tile_elems = sub_mult * w
    n_aligned = (n // tile_elems) * tile_elems

    if n_aligned == 0:
        # Tiny input: pad once to a single (sub_mult, w) tile (negligible).
        xp = jnp.pad(x, (0, tile_elems - n))
        out = _run_ghf_2d(xp.reshape(sub_mult, w), kernel, target_block_elems)
        return out.reshape(-1)[:n].reshape(orig_shape)

    out_main = _run_ghf_2d(
        x[:n_aligned].reshape(n_aligned // w, w), kernel, target_block_elems
    ).reshape(-1)

    if n_aligned == n:
        return out_main.reshape(orig_shape)

    # Ragged tail (< one (sub_mult, w) tile): plain jnp, XLA fuses it; avoids
    # materializing full-array pad + slice copies of a memory-bound tensor.
    out_tail = _ghf_jnp(x[n_aligned:], t, m1, m2)
    return jnp.concatenate([out_main, out_tail]).reshape(orig_shape)


if __name__ == "__main__":
    key = jax.random.PRNGKey(0)
    # Small NCHW input consistent with a CIFAR-style conv activation map.
    x = jax.random.normal(key, (2, 4, 16, 16), dtype=jnp.float32)

    out = jax.block_until_ready(act_ghf(x))
    ref = _ghf_jnp(x)

    assert out.shape == x.shape and out.dtype == x.dtype
    assert jnp.allclose(out, ref, atol=1e-5, rtol=1e-5)

    print("KERNEL_OK")
</pallas_src>

<mosaic_0001>
module attributes {stable_mosaic.version = 11 : i64} {
  func.func @kernel(%arg0: i32, %arg1: memref<8x256xf32, #tpu.memory_space<vmem>>, %arg2: memref<8x256xf32, #tpu.memory_space<vmem>>) attributes {dimension_semantics = [#tpu.dimension_semantics<parallel>], iteration_bounds = array<i64: 1>, scalar_prefetch = 0 : i64, scratch_operands = 0 : i64, tpu.core_type = #tpu.core_type<tc>, window_params = [{transform_indices = @transform_0, window_bounds = array<i64: 8, 256>}, {transform_indices = @transform_1, window_bounds = array<i64: 8, 256>}]} {
    %c0 = arith.constant 0 : index
    %c0_0 = arith.constant 0 : index
    %0 = vector.load %arg1[%c0, %c0_0] : memref<8x256xf32, #tpu.memory_space<vmem>>, vector<8x256xf32>
    %cst = arith.constant 1.000000e+00 : f32
    %1 = vector.broadcast %cst : f32 to vector<8x256xf32>
    %2 = arith.mulf %0, %1 : vector<8x256xf32>
    %cst_1 = arith.constant 1.60943794 : f32
    %3 = vector.broadcast %cst_1 : f32 to vector<8x256xf32>
    %4 = arith.subf %2, %3 : vector<8x256xf32>
    %5 = math.tanh %4 : vector<8x256xf32>
    %cst_2 = arith.constant 1.000000e+00 : f32
    %6 = vector.broadcast %cst_2 : f32 to vector<8x256xf32>
    %7 = arith.addf %6, %5 : vector<8x256xf32>
    %cst_3 = arith.constant 2.497500e-01 : f32
    %8 = vector.broadcast %cst_3 : f32 to vector<8x256xf32>
    %9 = arith.mulf %8, %7 : vector<8x256xf32>
    %c0_4 = arith.constant 0 : index
    %c0_5 = arith.constant 0 : index
    %10 = vector.load %arg2[%c0_4, %c0_5] : memref<8x256xf32, #tpu.memory_space<vmem>>, vector<8x256xf32>
    tpu.vector_store %arg2[%c0_4, %c0_5], %9 {strides = array<i32>} : memref<8x256xf32, #tpu.memory_space<vmem>>, vector<8x256xf32>,
    return
  }
  func.func @transform_0(%arg0: i32) -> (i32, i32) {
    %c0_i32 = arith.constant 0 : i32
    %c0_i32_0 = arith.constant 0 : i32
    return %arg0, %c0_i32 : i32, i32
  }
  func.func @transform_1(%arg0: i32) -> (i32, i32) {
    %c0_i32 = arith.constant 0 : i32
    %c0_i32_0 = arith.constant 0 : i32
    return %arg0, %c0_i32 : i32, i32
  }
}

</mosaic_0001>

<llo_original>
// kernel: tpu_custom_call.1
$region0: #{tpu_custom_call.1}
  #allocation0 [shape = 'u32[]', space=smem, size = 0x4, offset = 0x4, fixed_abs, tag = 'smem constant byte address 0x4 - core index']
  #allocation1 [shape = 'u32[144,128]{1,0:T(1,128)}', space=vmem, size = 0x12000, scoped, tag = 'internal scratch']
  %s0 = inlined_call_operand.hbm [shape: f32[8,256], index: 0, kind: input, shape index: {}]
  %s1 = inlined_call_operand.hbm [shape: f32[8,256], index: 1, kind: output, shape index: {}]
  %s2 = sld [smem:[#allocation0]]
  $region18: #{tpu_custom_call.1} parent=0
    _
  %s4 = ssub.s32 1, %s2
  %s5 = scalar_select 0, %s4, %s2
  $region1: #{tpu_custom_call.1} parent=0
    #allocation2 [shape = 'u8[8192]{0}', space=vmem, size = 0x2000, scoped, tag = 'input window, operand 0, single buffered']
    #allocation3 [shape = 's32[1]{0}', space=sflag, size = 0x4, scoped, tag = 'scoped memory for tpu_custom_call.1']
    #allocation4 [shape = 's32[1]{0}', space=sflag, size = 0x4, scoped, tag = 'scoped memory for tpu_custom_call.1']
    #allocation5 [shape = 'u8[8192]{0}', space=vmem, size = 0x2000, scoped, tag = 'output window, operand 0, single buffered']
    %6 = vsyncpa [#allocation3], 0
    %7 = vsyncpa [#allocation4], 0
    // Predicated region
    $region2: #{tpu_custom_call.1} parent=1 // pred_check
      _
    $region3: #{tpu_custom_call.1} parent=1 // pred_check_branch
      %9 = sbr.rel (0) target = $region5
    $region4: #{tpu_custom_call.1} parent=1 // pred_region
      %s11 = ssub.s32 256, 256
      %12 = vsyncadd [#allocation3], %s11
      %s14 = sshll.u32 [#allocation2], 4
      %s15 = int_to_ptr.vmem [resolvable:$true] %s14
      %17 = dma.hbm_to_vmem [thread:$0]  %s0, 256, %s15, [#allocation3]
    $region5: #{tpu_custom_call.1} parent=1 // pred_fallthru
      _
    // Predicated region
    $region6: #{tpu_custom_call.1} parent=1 // pred_check
      _
    $region7: #{tpu_custom_call.1} parent=1 // pred_check_branch
      %19 = sbr.rel (0) target = $region9
    $region8: #{tpu_custom_call.1} parent=1 // pred_region
      %20 = dma.done [#allocation3], 256
    $region9: #{tpu_custom_call.1} parent=1 // pred_fallthru
      _
    %v21 = vld [vmem:[#allocation2] sm:$0xff]
    %v22 = vld [vmem:[#allocation2 + $0x8] sm:$0xff]
    %v23 = vsub.f32 %v21, 1.609438
    %v24 = vsub.f32 %v22, 1.609438
    %v25 = vtanh.pop %v23
    %v26 = vtanh.pop %v24
    %v27 = vadd.f32 %v25, 1.0
    %v28 = vadd.f32 %v26, 1.0
    %v29 = vmul.f32 %v27, 0.24975
    %v30 = vmul.f32 %v28, 0.24975
    %31 = vst [vmem:[#allocation5] sm:$0xff] %v29
    %32 = vst [vmem:[#allocation5 + $0x8] sm:$0xff] %v30
    // Predicated region
    $region10: #{tpu_custom_call.1} parent=1 // pred_check
      _
    $region11: #{tpu_custom_call.1} parent=1 // pred_check_branch
      %34 = sbr.rel (0) target = $region13
    $region12: #{tpu_custom_call.1} parent=1 // pred_region
      %s36 = ssub.s32 256, 256
      %37 = vsyncadd [#allocation4], %s36
      %s39 = sshll.u32 [#allocation5], 4
      %s40 = int_to_ptr.vmem [resolvable:$true] %s39
      %42 = dma.vmem_to_hbm [thread:$0]  %s40, 256, %s1, [#allocation4]
    $region13: #{tpu_custom_call.1} parent=1 // pred_fallthru
      _
    // Predicated region
    $region14: #{tpu_custom_call.1} parent=1 // pred_check
      _
    $region15: #{tpu_custom_call.1} parent=1 // pred_check_branch
      %44 = sbr.rel (0) target = $region17
    $region16: #{tpu_custom_call.1} parent=1 // pred_region
      %45 = dma.done [#allocation4], 256
    $region17: #{tpu_custom_call.1} parent=1 // pred_fallthru
      _
    %46 = vsyncpa [#allocation3], 1
    %47 = vsyncpa [#allocation4], 1

</llo_original>
